<compile_context>
chip_gen: v5e
topology: v5e:2x2
jax: 0.10.0
libtpu: 0.0.40
codegen_flags: <defaults>
</compile_context>

<pallas_src>
import math
from functools import partial

import jax
import jax.numpy as jnp
from jax import lax
from jax.experimental import pallas as pl
from jax.experimental.pallas import tpu as pltpu

H1, H2, H3 = 500, 300, 100


def _round_up(x, m):
    return ((x + m - 1) // m) * m


def _pad2d(x, rows, cols):
    return jnp.pad(x, ((0, rows - x.shape[0]), (0, cols - x.shape[1])))


def dactor_kernel(x_ref,
                  w1_ref, b1_ref,
                  w2_ref, b2_ref,
                  w3_ref, b3_ref,
                  w4_ref, b4_ref,
                  out_ref,
                  *, action_dim):
    def dense(h, w_ref, b_ref):
        # bf16 MXU inputs, f32 accumulation; padded rows/cols are exact zeros.
        return jnp.dot(h.astype(jnp.bfloat16), w_ref[...],
                       preferred_element_type=jnp.float32) + b_ref[...]

    h = jnp.maximum(dense(x_ref[...], w1_ref, b1_ref), 0.0)
    h = jnp.maximum(dense(h, w2_ref, b2_ref), 0.0)
    h = jnp.maximum(dense(h, w3_ref, b3_ref), 0.0)
    z = dense(h, w4_ref, b4_ref)                       # [TB, A_pad], f32

    # PositiveSoftmaxTanh on the first `action_dim` lanes of each row:
    #   cols [0, action_dim-2] -> tanh; strictly-positive values normalized
    #                             by the per-row sum of positive values
    #   col  action_dim-1      -> sigmoid of the raw logit
    #   padded cols            -> 0 (sliced away host-side)
    col = lax.broadcasted_iota(jnp.int32, z.shape, 1)
    tanh_mask = col < (action_dim - 1)
    sig_mask = col == (action_dim - 1)

    t = jnp.tanh(z)
    s = jax.nn.sigmoid(z)

    pos = jnp.logical_and(t > 0.0, tanh_mask)
    pos_sum = jnp.sum(jnp.where(pos, t, 0.0), axis=-1, keepdims=True)
    denom = jnp.where(pos_sum > 0.0, pos_sum, 1.0)     # no positives -> unchanged
    t = jnp.where(pos, t / denom, t)

    out = jnp.where(sig_mask, s, jnp.where(tanh_mask, t, 0.0))
    out_ref[...] = out.astype(out_ref.dtype)


def init_params(key, state_dim, action_dim):
    """torch.nn.Linear default init: U(-1/sqrt(fan_in), +1/sqrt(fan_in))."""
    dims_in = [state_dim, H1, H2, H3]
    dims_out = [H1, H2, H3, action_dim]
    params = []
    for din, dout in zip(dims_in, dims_out):
        key, kw, kb = jax.random.split(key, 3)
        bound = 1.0 / math.sqrt(din)
        # stored as [in, out] (transposed relative to torch's [out, in])
        w = jax.random.uniform(kw, (din, dout), jnp.float32, -bound, bound)
        b = jax.random.uniform(kb, (1, dout), jnp.float32, -bound, bound)
        params += [w, b]
    return params


def dactor_forward(state, params, action_dim, *, max_batch_tile=256):
    w1, b1, w2, b2, w3, b3, w4, b4 = params
    B, state_dim = state.shape

    # lane-pad every feature dimension to a multiple of 128
    D0 = _round_up(state_dim, 128)
    H1p, H2p, H3p = _round_up(H1, 128), _round_up(H2, 128), _round_up(H3, 128)
    Ap = _round_up(action_dim, 128)

    # batch tile: multiple of 8 sublanes, capped so two pipeline buffers of
    # activations stay tiny relative to VMEM on every TPU generation.
    TB = min(max_batch_tile, _round_up(B, 8))
    B_pad = _round_up(B, TB)

    x = _pad2d(state.astype(jnp.float32), B_pad, D0)

    bf16 = jnp.bfloat16
    w1p = _pad2d(w1, D0, H1p).astype(bf16)
    w2p = _pad2d(w2, H1p, H2p).astype(bf16)
    w3p = _pad2d(w3, H2p, H3p).astype(bf16)
    w4p = _pad2d(w4, H3p, Ap).astype(bf16)
    b1p = _pad2d(b1, 1, H1p)          # padded bias entries are exactly zero
    b2p = _pad2d(b2, 1, H2p)
    b3p = _pad2d(b3, 1, H3p)
    b4p = _pad2d(b4, 1, Ap)

    def fixed(shape):                  # weight/bias stays resident in VMEM
        return pl.BlockSpec(shape, lambda i: (0, 0))

    in_specs = [
        pl.BlockSpec((TB, D0), lambda i: (i, 0)),
        fixed((D0, H1p)), fixed((1, H1p)),
        fixed((H1p, H2p)), fixed((1, H2p)),
        fixed((H2p, H3p)), fixed((1, H3p)),
        fixed((H3p, Ap)), fixed((1, Ap)),
    ]
    out_specs = pl.BlockSpec((TB, Ap), lambda i: (i, 0))

    compiler_params = None
    if jax.default_backend() == "tpu":
        compiler_params = pltpu.CompilerParams(
            dimension_semantics=("parallel",))

    out = pl.pallas_call(
        partial(dactor_kernel, action_dim=action_dim),
        out_shape=jax.ShapeDtypeStruct((B_pad, Ap), jnp.float32),
        grid=(B_pad // TB,),
        in_specs=in_specs,
        out_specs=out_specs,
        compiler_params=compiler_params,
    )(x, w1p, b1p, w2p, b2p, w3p, b3p, w4p, b4p)

    return out[:B, :action_dim]


if __name__ == "__main__":
    state_dim, action_dim, batch = 24, 6, 2

    key = jax.random.PRNGKey(0)
    kp, ks = jax.random.split(key)
    params = init_params(kp, state_dim, action_dim)
    state = jax.random.normal(ks, (batch, state_dim), jnp.float32)

    out = dactor_forward(state, params, action_dim)
    out = jax.block_until_ready(out)

    assert out.shape == (batch, action_dim)
    assert bool(jnp.all(jnp.isfinite(out)))
    # tanh / normalized-positive / sigmoid outputs all lie in [-1, 1]
    assert bool(jnp.all(jnp.abs(out) <= 1.0 + 1e-3))
    print("KERNEL_OK")
</pallas_src>

<mosaic_0001>
module attributes {stable_mosaic.version = 11 : i64} {
  func.func @dactor_kernel(%arg0: i32, %arg1: memref<8x128xf32, #tpu.memory_space<vmem>>, %arg2: memref<128x512xbf16, #tpu.memory_space<vmem>>, %arg3: memref<1x512xf32, #tpu.memory_space<vmem>>, %arg4: memref<512x384xbf16, #tpu.memory_space<vmem>>, %arg5: memref<1x384xf32, #tpu.memory_space<vmem>>, %arg6: memref<384x128xbf16, #tpu.memory_space<vmem>>, %arg7: memref<1x128xf32, #tpu.memory_space<vmem>>, %arg8: memref<128x128xbf16, #tpu.memory_space<vmem>>, %arg9: memref<1x128xf32, #tpu.memory_space<vmem>>, %arg10: memref<8x128xf32, #tpu.memory_space<vmem>>) attributes {dimension_semantics = [#tpu.dimension_semantics<arbitrary>], iteration_bounds = array<i64: 1>, scalar_prefetch = 0 : i64, scratch_operands = 0 : i64, tpu.core_type = #tpu.core_type<tc>, window_params = [{transform_indices = @transform_0, window_bounds = array<i64: 8, 128>}, {pipeline_mode = #tpu.pipeline_mode<synchronous>, transform_indices = @transform_1, window_bounds = array<i64: 128, 512>}, {pipeline_mode = #tpu.pipeline_mode<synchronous>, transform_indices = @transform_2, window_bounds = array<i64: 1, 512>}, {pipeline_mode = #tpu.pipeline_mode<synchronous>, transform_indices = @transform_3, window_bounds = array<i64: 512, 384>}, {pipeline_mode = #tpu.pipeline_mode<synchronous>, transform_indices = @transform_4, window_bounds = array<i64: 1, 384>}, {pipeline_mode = #tpu.pipeline_mode<synchronous>, transform_indices = @transform_5, window_bounds = array<i64: 384, 128>}, {pipeline_mode = #tpu.pipeline_mode<synchronous>, transform_indices = @transform_6, window_bounds = array<i64: 1, 128>}, {pipeline_mode = #tpu.pipeline_mode<synchronous>, transform_indices = @transform_7, window_bounds = array<i64: 128, 128>}, {pipeline_mode = #tpu.pipeline_mode<synchronous>, transform_indices = @transform_8, window_bounds = array<i64: 1, 128>}, {transform_indices = @transform_9, window_bounds = array<i64: 8, 128>}]} {
    %c0 = arith.constant 0 : index
    %c0_0 = arith.constant 0 : index
    %0 = vector.load %arg1[%c0, %c0_0] : memref<8x128xf32, #tpu.memory_space<vmem>>, vector<8x128xf32>
    %1 = arith.truncf %0 : vector<8x128xf32> to vector<8x128xbf16>
    %c0_1 = arith.constant 0 : index
    %c0_2 = arith.constant 0 : index
    %2 = vector.load %arg2[%c0_1, %c0_2] : memref<128x512xbf16, #tpu.memory_space<vmem>>, vector<128x512xbf16>
    %cst = arith.constant dense<0.000000e+00> : vector<8x512xf32>
    %3 = tpu.matmul %1, %2, %cst {dimension_numbers = #tpu.dot_dimension_numbers<[1], [0], [0], [1], [0, 0, 1, 1], [], []>} : vector<8x128xbf16>, vector<128x512xbf16>, vector<8x512xf32> -> vector<8x512xf32>
    %c0_3 = arith.constant 0 : index
    %c0_4 = arith.constant 0 : index
    %4 = vector.load %arg3[%c0_3, %c0_4] : memref<1x512xf32, #tpu.memory_space<vmem>>, vector<1x512xf32>
    %5 = vector.broadcast %4 : vector<1x512xf32> to vector<8x512xf32>
    %6 = arith.addf %3, %5 : vector<8x512xf32>
    %cst_5 = arith.constant 0.000000e+00 : f32
    %7 = vector.broadcast %cst_5 : f32 to vector<8x512xf32>
    %8 = arith.maximumf %6, %7 : vector<8x512xf32>
    %9 = arith.truncf %8 : vector<8x512xf32> to vector<8x512xbf16>
    %c0_6 = arith.constant 0 : index
    %c0_7 = arith.constant 0 : index
    %10 = vector.load %arg4[%c0_6, %c0_7] : memref<512x384xbf16, #tpu.memory_space<vmem>>, vector<512x384xbf16>
    %cst_8 = arith.constant dense<0.000000e+00> : vector<8x384xf32>
    %11 = tpu.matmul %9, %10, %cst_8 {dimension_numbers = #tpu.dot_dimension_numbers<[1], [0], [0], [1], [0, 0, 1, 1], [], []>} : vector<8x512xbf16>, vector<512x384xbf16>, vector<8x384xf32> -> vector<8x384xf32>
    %c0_9 = arith.constant 0 : index
    %c0_10 = arith.constant 0 : index
    %12 = vector.load %arg5[%c0_9, %c0_10] : memref<1x384xf32, #tpu.memory_space<vmem>>, vector<1x384xf32>
    %13 = vector.broadcast %12 : vector<1x384xf32> to vector<8x384xf32>
    %14 = arith.addf %11, %13 : vector<8x384xf32>
    %cst_11 = arith.constant 0.000000e+00 : f32
    %15 = vector.broadcast %cst_11 : f32 to vector<8x384xf32>
    %16 = arith.maximumf %14, %15 : vector<8x384xf32>
    %17 = arith.truncf %16 : vector<8x384xf32> to vector<8x384xbf16>
    %c0_12 = arith.constant 0 : index
    %c0_13 = arith.constant 0 : index
    %18 = vector.load %arg6[%c0_12, %c0_13] : memref<384x128xbf16, #tpu.memory_space<vmem>>, vector<384x128xbf16>
    %cst_14 = arith.constant dense<0.000000e+00> : vector<8x128xf32>
    %19 = tpu.matmul %17, %18, %cst_14 {dimension_numbers = #tpu.dot_dimension_numbers<[1], [0], [0], [1], [0, 0, 1, 1], [], []>} : vector<8x384xbf16>, vector<384x128xbf16>, vector<8x128xf32> -> vector<8x128xf32>
    %c0_15 = arith.constant 0 : index
    %c0_16 = arith.constant 0 : index
    %20 = vector.load %arg7[%c0_15, %c0_16] : memref<1x128xf32, #tpu.memory_space<vmem>>, vector<1x128xf32>
    %21 = vector.broadcast %20 : vector<1x128xf32> to vector<8x128xf32>
    %22 = arith.addf %19, %21 : vector<8x128xf32>
    %cst_17 = arith.constant 0.000000e+00 : f32
    %23 = vector.broadcast %cst_17 : f32 to vector<8x128xf32>
    %24 = arith.maximumf %22, %23 : vector<8x128xf32>
    %25 = arith.truncf %24 : vector<8x128xf32> to vector<8x128xbf16>
    %c0_18 = arith.constant 0 : index
    %c0_19 = arith.constant 0 : index
    %26 = vector.load %arg8[%c0_18, %c0_19] : memref<128x128xbf16, #tpu.memory_space<vmem>>, vector<128x128xbf16>
    %cst_20 = arith.constant dense<0.000000e+00> : vector<8x128xf32>
    %27 = tpu.matmul %25, %26, %cst_20 {dimension_numbers = #tpu.dot_dimension_numbers<[1], [0], [0], [1], [0, 0, 1, 1], [], []>} : vector<8x128xbf16>, vector<128x128xbf16>, vector<8x128xf32> -> vector<8x128xf32>
    %c0_21 = arith.constant 0 : index
    %c0_22 = arith.constant 0 : index
    %28 = vector.load %arg9[%c0_21, %c0_22] : memref<1x128xf32, #tpu.memory_space<vmem>>, vector<1x128xf32>
    %29 = vector.broadcast %28 : vector<1x128xf32> to vector<8x128xf32>
    %30 = arith.addf %27, %29 : vector<8x128xf32>
    %31 = tpu.iota {dimensions = array<i32: 1>} : vector<8x128xi32>
    %c5_i32 = arith.constant 5 : i32
    %32 = vector.broadcast %c5_i32 : i32 to vector<8x128xi32>
    %33 = arith.cmpi slt, %31, %32 : vector<8x128xi32>
    %c5_i32_23 = arith.constant 5 : i32
    %34 = vector.broadcast %c5_i32_23 : i32 to vector<8x128xi32>
    %35 = arith.cmpi eq, %31, %34 : vector<8x128xi32>
    %36 = math.tanh %30 : vector<8x128xf32>
    %37 = arith.negf %30 : vector<8x128xf32>
    %38 = math.exp %37 : vector<8x128xf32>
    %cst_24 = arith.constant 1.000000e+00 : f32
    %39 = vector.broadcast %cst_24 : f32 to vector<8x128xf32>
    %40 = arith.addf %39, %38 : vector<8x128xf32>
    %41 = arith.divf %39, %40 : vector<8x128xf32>
    %cst_25 = arith.constant 0.000000e+00 : f32
    %42 = vector.broadcast %cst_25 : f32 to vector<8x128xf32>
    %43 = arith.cmpf ogt, %36, %42 : vector<8x128xf32>
    %44 = arith.andi %43, %33 : vector<8x128xi1>
    %cst_26 = arith.constant 0.000000e+00 : f32
    %45 = vector.broadcast %cst_26 : f32 to vector<8x128xf32>
    %46 = arith.select %44, %36, %45 : vector<8x128xi1>, vector<8x128xf32>
    %cst_27 = arith.constant dense<0.000000e+00> : vector<8xf32>
    %47 = vector.multi_reduction <add>, %46, %cst_27 [1] : vector<8x128xf32> to vector<8xf32>
    %48 = vector.shape_cast %47 : vector<8xf32> to vector<8x1xf32>
    %cst_28 = arith.constant 0.000000e+00 : f32
    %49 = vector.broadcast %cst_28 : f32 to vector<8x1xf32>
    %50 = arith.cmpf ogt, %48, %49 : vector<8x1xf32>
    %cst_29 = arith.constant 1.000000e+00 : f32
    %51 = vector.broadcast %cst_29 : f32 to vector<8x1xf32>
    %52 = arith.select %50, %48, %51 : vector<8x1xi1>, vector<8x1xf32>
    %53 = vector.broadcast %52 : vector<8x1xf32> to vector<8x128xf32>
    %54 = arith.divf %36, %53 : vector<8x128xf32>
    %55 = arith.select %44, %54, %36 : vector<8x128xi1>, vector<8x128xf32>
    %cst_30 = arith.constant 0.000000e+00 : f32
    %56 = vector.broadcast %cst_30 : f32 to vector<8x128xf32>
    %57 = arith.select %33, %55, %56 : vector<8x128xi1>, vector<8x128xf32>
    %58 = arith.select %35, %41, %57 : vector<8x128xi1>, vector<8x128xf32>
    %c0_31 = arith.constant 0 : index
    %c0_32 = arith.constant 0 : index
    %59 = vector.load %arg10[%c0_31, %c0_32] : memref<8x128xf32, #tpu.memory_space<vmem>>, vector<8x128xf32>
    tpu.vector_store %arg10[%c0_31, %c0_32], %58 {strides = array<i32>} : memref<8x128xf32, #tpu.memory_space<vmem>>, vector<8x128xf32>,
    return
  }
  func.func @transform_0(%arg0: i32) -> (i32, i32) {
    %c0_i32 = arith.constant 0 : i32
    %c0_i32_0 = arith.constant 0 : i32
    return %arg0, %c0_i32 : i32, i32
  }
  func.func @transform_1(%arg0: i32) -> (i32, i32) {
    %c0_i32 = arith.constant 0 : i32
    %c0_i32_0 = arith.constant 0 : i32
    %c0_i32_1 = arith.constant 0 : i32
    return %c0_i32, %c0_i32_0 : i32, i32
  }
  func.func @transform_2(%arg0: i32) -> (i32, i32) {
    %c0_i32 = arith.constant 0 : i32
    %c0_i32_0 = arith.constant 0 : i32
    %c0_i32_1 = arith.constant 0 : i32
    return %c0_i32, %c0_i32_0 : i32, i32
  }
  func.func @transform_3(%arg0: i32) -> (i32, i32) {
    %c0_i32 = arith.constant 0 : i32
    %c0_i32_0 = arith.constant 0 : i32
    %c0_i32_1 = arith.constant 0 : i32
    return %c0_i32, %c0_i32_0 : i32, i32
  }
  func.func @transform_4(%arg0: i32) -> (i32, i32) {
    %c0_i32 = arith.constant 0 : i32
    %c0_i32_0 = arith.constant 0 : i32
    %c0_i32_1 = arith.constant 0 : i32
    return %c0_i32, %c0_i32_0 : i32, i32
  }
  func.func @transform_5(%arg0: i32) -> (i32, i32) {
    %c0_i32 = arith.constant 0 : i32
    %c0_i32_0 = arith.constant 0 : i32
    %c0_i32_1 = arith.constant 0 : i32
    return %c0_i32, %c0_i32_0 : i32, i32
  }
  func.func @transform_6(%arg0: i32) -> (i32, i32) {
    %c0_i32 = arith.constant 0 : i32
    %c0_i32_0 = arith.constant 0 : i32
    %c0_i32_1 = arith.constant 0 : i32
    return %c0_i32, %c0_i32_0 : i32, i32
  }
  func.func @transform_7(%arg0: i32) -> (i32, i32) {
    %c0_i32 = arith.constant 0 : i32
    %c0_i32_0 = arith.constant 0 : i32
    %c0_i32_1 = arith.constant 0 : i32
    return %c0_i32, %c0_i32_0 : i32, i32
  }
  func.func @transform_8(%arg0: i32) -> (i32, i32) {
    %c0_i32 = arith.constant 0 : i32
    %c0_i32_0 = arith.constant 0 : i32
    %c0_i32_1 = arith.constant 0 : i32
    return %c0_i32, %c0_i32_0 : i32, i32
  }
  func.func @transform_9(%arg0: i32) -> (i32, i32) {
    %c0_i32 = arith.constant 0 : i32
    %c0_i32_0 = arith.constant 0 : i32
    return %arg0, %c0_i32 : i32, i32
  }
}

</mosaic_0001>

<llo_original>
// kernel: tpu_custom_call.1
$region0: #{tpu_custom_call.1}
  #allocation0 [shape = 'u32[]', space=smem, size = 0x4, offset = 0x4, fixed_abs, tag = 'smem constant byte address 0x4 - core index']
  #allocation1 [shape = 'u32[72,128]{1,0:T(1,128)}', space=vmem, size = 0x9000, scoped, tag = 'internal scratch']
  %s0 = inlined_call_operand.hbm [shape: f32[8,128], index: 0, kind: input, shape index: {}]
  %s1 = inlined_call_operand.hbm [shape: bf16[128,512], index: 1, kind: input, shape index: {}]
  %s2 = inlined_call_operand.hbm [shape: f32[1,512], index: 2, kind: input, shape index: {}]
  %s3 = inlined_call_operand.hbm [shape: bf16[512,384], index: 3, kind: input, shape index: {}]
  %s4 = inlined_call_operand.vmem [shape: f32[1,384], index: 4, kind: input, shape index: {}]
  %s5 = inlined_call_operand.hbm [shape: bf16[384,128], index: 5, kind: input, shape index: {}]
  %s6 = inlined_call_operand.vmem [shape: f32[1,128], index: 6, kind: input, shape index: {}]
  %s7 = inlined_call_operand.hbm [shape: bf16[128,128], index: 7, kind: input, shape index: {}]
  %s8 = inlined_call_operand.vmem [shape: f32[1,128], index: 8, kind: input, shape index: {}]
  %s9 = inlined_call_operand.hbm [shape: f32[8,128], index: 9, kind: output, shape index: {}]
  %s10 = sld [smem:[#allocation0]]
  $region70: #{tpu_custom_call.1} parent=0
    _
  %s12 = ssub.s32 1, %s10
  %s13 = scalar_select 0, %s12, %s10
  $region1: #{tpu_custom_call.1} parent=0
    #allocation2 [shape = 'u8[4096]{0}', space=vmem, size = 0x1000, scoped, tag = 'input window, operand 0, single buffered']
    #allocation3 [shape = 's32[1]{0}', space=sflag, size = 0x4, scoped, tag = 'scoped memory for tpu_custom_call.1']
    #allocation4 [shape = 's32[1]{0}', space=sflag, size = 0x4, scoped, tag = 'scoped memory for tpu_custom_call.1']
    #allocation5 [shape = 'u8[131072]{0}', space=vmem, size = 0x20000, scoped, tag = 'input window, operand 1, single buffered']
    #allocation6 [shape = 's32[1]{0}', space=sflag, size = 0x4, scoped, tag = 'scoped memory for tpu_custom_call.1']
    #allocation7 [shape = 'u8[2048]{0}', space=vmem, size = 0x800, scoped, tag = 'input window, operand 2, single buffered']
    #allocation8 [shape = 'u8[393216]{0}', space=vmem, size = 0x60000, scoped, tag = 'input window, operand 3, single buffered']
    #allocation9 [shape = 's32[1]{0}', space=sflag, size = 0x4, scoped, tag = 'scoped memory for tpu_custom_call.1']
    #allocation10 [shape = 'u8[98304]{0}', space=vmem, size = 0x18000, scoped, tag = 'input window, operand 5, single buffered']
    #allocation11 [shape = 'u8[32768]{0}', space=vmem, size = 0x8000, scoped, tag = 'input window, operand 7, single buffered']
    #allocation12 [shape = 's32[1]{0}', space=sflag, size = 0x4, scoped, tag = 'scoped memory for tpu_custom_call.1']
    #allocation13 [shape = 'u8[4096]{0}', space=vmem, size = 0x1000, scoped, tag = 'output window, operand 0, single buffered']
    %14 = vsyncpa [#allocation3], 0
    %15 = vsyncpa [#allocation6], 0
    %16 = vsyncpa [#allocation9], 0
    %17 = vsyncpa [#allocation12], 0
    %18 = vsyncpa [#allocation4], 0
    // Predicated region
    $region2: #{tpu_custom_call.1} parent=1 // pred_check
      _
    $region3: #{tpu_custom_call.1} parent=1 // pred_check_branch
      %20 = sbr.rel (0) target = $region5
    $region4: #{tpu_custom_call.1} parent=1 // pred_region
      %22 = vsyncadd [#allocation3], 0
      %s24 = sshll.u32 %s0, 4
      %s25 = int_to_ptr.hbm [resolvable:$true] %s24
      %s26 = sshll.u32 [#allocation2], 4
      %s27 = int_to_ptr.vmem [resolvable:$true] %s26
      %29 = dma.hbm_to_vmem [thread:$0]  %s25, 128, %s27, [#allocation3]
    $region5: #{tpu_custom_call.1} parent=1 // pred_fallthru
      _
    // Predicated region
    $region6: #{tpu_custom_call.1} parent=1 // pred_check
      _
    $region7: #{tpu_custom_call.1} parent=1 // pred_check_branch
      %31 = sbr.rel (0) target = $region9
    $region8: #{tpu_custom_call.1} parent=1 // pred_region
      %33 = vsyncadd [#allocation6], 0
      %s34 = sshll.u32 %s1, 4
      %s35 = int_to_ptr.hbm [resolvable:$true] %s34
      %s36 = sshll.u32 [#allocation5], 4
      %s37 = int_to_ptr.vmem [resolvable:$true] %s36
      %42 = dma.hbm_to_vmem [thread:$0]  %s35, 4096, %s37, [#allocation6], 256, 256, 16
    $region9: #{tpu_custom_call.1} parent=1 // pred_fallthru
      _
    // Predicated region
    $region10: #{tpu_custom_call.1} parent=1 // pred_check
      _
    $region11: #{tpu_custom_call.1} parent=1 // pred_check_branch
      %44 = sbr.rel (0) target = $region13
    $region12: #{tpu_custom_call.1} parent=1 // pred_region
      %46 = vsyncadd [#allocation6], 0
      %s48 = sshll.u32 %s2, 4
      %s49 = int_to_ptr.hbm [resolvable:$true] %s48
      %s50 = sshll.u32 [#allocation7], 4
      %s51 = int_to_ptr.vmem [resolvable:$true] %s50
      %53 = dma.hbm_to_vmem [thread:$0]  %s49, 64, %s51, [#allocation6]
    $region13: #{tpu_custom_call.1} parent=1 // pred_fallthru
      _
    // Predicated region
    $region14: #{tpu_custom_call.1} parent=1 // pred_check
      _
    $region15: #{tpu_custom_call.1} parent=1 // pred_check_branch
      %55 = sbr.rel (0) target = $region17
    $region16: #{tpu_custom_call.1} parent=1 // pred_region
      %57 = vsyncadd [#allocation9], 0
      %s58 = sshll.u32 %s3, 4
      %s59 = int_to_ptr.hbm [resolvable:$true] %s58
      %s60 = sshll.u32 [#allocation8], 4
      %s61 = int_to_ptr.vmem [resolvable:$true] %s60
      %66 = dma.hbm_to_vmem [thread:$0]  %s59, 12288, %s61, [#allocation9], 192, 192, 12
    $region17: #{tpu_custom_call.1} parent=1 // pred_fallthru
      _
    // Predicated region
    $region18: #{tpu_custom_call.1} parent=1 // pred_check
      _
    $region19: #{tpu_custom_call.1} parent=1 // pred_check_branch
      %68 = sbr.rel (0) target = $region21
    $region20: #{tpu_custom_call.1} parent=1 // pred_region
      _
    $region21: #{tpu_custom_call.1} parent=1 // pred_fallthru
      _
    // Predicated region
    $region22: #{tpu_custom_call.1} parent=1 // pred_check
      _
    $region23: #{tpu_custom_call.1} parent=1 // pred_check_branch
      %70 = sbr.rel (0) target = $region25
    $region24: #{tpu_custom_call.1} parent=1 // pred_region
      %72 = vsyncadd [#allocation9], 0
      %s73 = sshll.u32 %s5, 4
      %s74 = int_to_ptr.hbm [resolvable:$true] %s73
      %s75 = sshll.u32 [#allocation10], 4
      %s76 = int_to_ptr.vmem [resolvable:$true] %s75
      %81 = dma.hbm_to_vmem [thread:$0]  %s74, 3072, %s76, [#allocation9], 64, 64, 4
    $region25: #{tpu_custom_call.1} parent=1 // pred_fallthru
      _
    // Predicated region
    $region26: #{tpu_custom_call.1} parent=1 // pred_check
      _
    $region27: #{tpu_custom_call.1} parent=1 // pred_check_branch
      %83 = sbr.rel (0) target = $region29
    $region28: #{tpu_custom_call.1} parent=1 // pred_region
      _
    $region29: #{tpu_custom_call.1} parent=1 // pred_fallthru
      _
    // Predicated region
    $region30: #{tpu_custom_call.1} parent=1 // pred_check
      _
    $region31: #{tpu_custom_call.1} parent=1 // pred_check_branch
      %85 = sbr.rel (0) target = $region33
    $region32: #{tpu_custom_call.1} parent=1 // pred_region
      %87 = vsyncadd [#allocation12], 0
      %s88 = sshll.u32 %s7, 4
      %s89 = int_to_ptr.hbm [resolvable:$true] %s88
      %s90 = sshll.u32 [#allocation11], 4
      %s91 = int_to_ptr.vmem [resolvable:$true] %s90
      %96 = dma.hbm_to_vmem [thread:$0]  %s89, 1024, %s91, [#allocation12], 64, 64, 4
    $region33: #{tpu_custom_call.1} parent=1 // pred_fallthru
      _
    // Predicated region
    $region34: #{tpu_custom_call.1} parent=1 // pred_check
      _
    $region35: #{tpu_custom_call.1} parent=1 // pred_check_branch
      %98 = sbr.rel (0) target = $region37
    $region36: #{tpu_custom_call.1} parent=1 // pred_region
      _
    $region37: #{tpu_custom_call.1} parent=1 // pred_fallthru
      _
    // Predicated region
    $region38: #{tpu_custom_call.1} parent=1 // pred_check
      _
    $region39: #{tpu_custom_call.1} parent=1 // pred_check_branch
      %100 = sbr.rel (0) target = $region41
    $region40: #{tpu_custom_call.1} parent=1 // pred_region
      %102 = dma.done [#allocation3], 128
    $region41: #{tpu_custom_call.1} parent=1 // pred_fallthru
      _
    // Predicated region
    $region42: #{tpu_custom_call.1} parent=1 // pred_check
      _
    $region43: #{tpu_custom_call.1} parent=1 // pred_check_branch
      %104 = sbr.rel (0) target = $region45
    $region44: #{tpu_custom_call.1} parent=1 // pred_region
      %106 = dma.done [#allocation6], 4096
    $region45: #{tpu_custom_call.1} parent=1 // pred_fallthru
      _
    // Predicated region
    $region46: #{tpu_custom_call.1} parent=1 // pred_check
      _
    $region47: #{tpu_custom_call.1} parent=1 // pred_check_branch
      %108 = sbr.rel (0) target = $region49
    $region48: #{tpu_custom_call.1} parent=1 // pred_region
      %110 = dma.done [#allocation6], 64
    $region49: #{tpu_custom_call.1} parent=1 // pred_fallthru
      _
    // Predicated region
    $region50: #{tpu_custom_call.1} parent=1 // pred_check
      _
    $region51: #{tpu_custom_call.1} parent=1 // pred_check_branch
      %112 = sbr.rel (0) target = $region53
    $region52: #{tpu_custom_call.1} parent=1 // pred_region
      %114 = dma.done [#allocation9], 12288
    $region53: #{tpu_custom_call.1} parent=1 // pred_fallthru
      _
    // Predicated region
    $region54: #{tpu_custom_call.1} parent=1 // pred_check
      _
    $region55: #{tpu_custom_call.1} parent=1 // pred_check_branch
      %116 = sbr.rel (0) target = $region57
    $region56: #{tpu_custom_call.1} parent=1 // pred_region
      %118 = dma.done [#allocation9], 3072
    $region57: #{tpu_custom_call.1} parent=1 // pred_fallthru
      _
    // Predicated region
    $region58: #{tpu_custom_call.1} parent=1 // pred_check
      _
    $region59: #{tpu_custom_call.1} parent=1 // pred_check_branch
      %120 = sbr.rel (0) target = $region61
    $region60: #{tpu_custom_call.1} parent=1 // pred_region
      %122 = dma.done [#allocation12], 1024
    $region61: #{tpu_custom_call.1} parent=1 // pred_fallthru
      _
    %v123 = vld [vmem:[#allocation2] sm:$0xff]
    %v124 = vpack.c.bf16 %v123, %v123
    %v125 = vld [vmem:[#allocation5] sm:$0xff]
    %v126 = vld [vmem:[#allocation5 + $0x8] sm:$0xff]
    %v127 = vld [vmem:[#allocation5 + $0x10] sm:$0xff]
    %v128 = vld [vmem:[#allocation5 + $0x18] sm:$0xff]
    %v129 = vld [vmem:[#allocation5 + $0x20] sm:$0xff]
    %v130 = vld [vmem:[#allocation5 + $0x28] sm:$0xff]
    %v131 = vld [vmem:[#allocation5 + $0x30] sm:$0xff]
    %v132 = vld [vmem:[#allocation5 + $0x38] sm:$0xff]
    %v133 = vld [vmem:[#allocation5 + $0x40] sm:$0xff]
    %v134 = vld [vmem:[#allocation5 + $0x48] sm:$0xff]
    %v135 = vld [vmem:[#allocation5 + $0x50] sm:$0xff]
    %v136 = vld [vmem:[#allocation5 + $0x58] sm:$0xff]
    %v137 = vld [vmem:[#allocation5 + $0x60] sm:$0xff]
    %v138 = vld [vmem:[#allocation5 + $0x68] sm:$0xff]
    %v139 = vld [vmem:[#allocation5 + $0x70] sm:$0xff]
    %v140 = vld [vmem:[#allocation5 + $0x78] sm:$0xff]
    %v141 = vld [vmem:[#allocation5 + $0x80] sm:$0xff]
    %v142 = vld [vmem:[#allocation5 + $0x88] sm:$0xff]
    %v143 = vld [vmem:[#allocation5 + $0x90] sm:$0xff]
    %v144 = vld [vmem:[#allocation5 + $0x98] sm:$0xff]
    %v145 = vld [vmem:[#allocation5 + $0xa0] sm:$0xff]
    %v146 = vld [vmem:[#allocation5 + $0xa8] sm:$0xff]
    %v147 = vld [vmem:[#allocation5 + $0xb0] sm:$0xff]
    %v148 = vld [vmem:[#allocation5 + $0xb8] sm:$0xff]
    %v149 = vld [vmem:[#allocation5 + $0xc0] sm:$0xff]
    %v150 = vld [vmem:[#allocation5 + $0xc8] sm:$0xff]
    %v151 = vld [vmem:[#allocation5 + $0xd0] sm:$0xff]
    %v152 = vld [vmem:[#allocation5 + $0xd8] sm:$0xff]
    %v153 = vld [vmem:[#allocation5 + $0xe0] sm:$0xff]
    %v154 = vld [vmem:[#allocation5 + $0xe8] sm:$0xff]
    %v155 = vld [vmem:[#allocation5 + $0xf0] sm:$0xff]
    %v156 = vld [vmem:[#allocation5 + $0xf8] sm:$0xff]
    %v157 = vld [vmem:[#allocation7] sm:$0xf]
    %v159 = vperm.slane %v157, 0
    %v160 = vperm.slane %v157, 1
    %v161 = vperm.slane %v157, 2
    %v162 = vperm.slane %v157, 3
    %v199 = vunpack.c.l.b16 %v125
    %v200 = vunpack.c.h.b16 %v125
    %v201 = vunpack.c.l.b16 %v126
    %v202 = vunpack.c.h.b16 %v126
    %v203 = vunpack.c.l.b16 %v127
    %v204 = vunpack.c.h.b16 %v127
    %v205 = vunpack.c.l.b16 %v128
    %v206 = vunpack.c.h.b16 %v128
    %v207 = vunpack.c.l.b16 %v129
    %v208 = vunpack.c.h.b16 %v129
    %v209 = vunpack.c.l.b16 %v130
    %v210 = vunpack.c.h.b16 %v130
    %v211 = vunpack.c.l.b16 %v131
    %v212 = vunpack.c.h.b16 %v131
    %v213 = vunpack.c.l.b16 %v132
    %v214 = vunpack.c.h.b16 %v132
    %v215 = vunpack.c.l.b16 %v133
    %v216 = vunpack.c.h.b16 %v133
    %v217 = vunpack.c.l.b16 %v134
    %v218 = vunpack.c.h.b16 %v134
    %v219 = vunpack.c.l.b16 %v135
    %v220 = vunpack.c.h.b16 %v135
    %v221 = vunpack.c.l.b16 %v136
    %v222 = vunpack.c.h.b16 %v136
    %v223 = vunpack.c.l.b16 %v137
    %v224 = vunpack.c.h.b16 %v137
    %v225 = vunpack.c.l.b16 %v138
    %v226 = vunpack.c.h.b16 %v138
    %v227 = vunpack.c.l.b16 %v139
    %v228 = vunpack.c.h.b16 %v139
    %v229 = vunpack.c.l.b16 %v140
    %v230 = vunpack.c.h.b16 %v140
    %v231 = vunpack.c.l.b16 %v141
    %v232 = vunpack.c.h.b16 %v141
    %v233 = vunpack.c.l.b16 %v142
    %v234 = vunpack.c.h.b16 %v142
    %v235 = vunpack.c.l.b16 %v143
    %v236 = vunpack.c.h.b16 %v143
    %v237 = vunpack.c.l.b16 %v144
    %v238 = vunpack.c.h.b16 %v144
    %v239 = vunpack.c.l.b16 %v145
    %v240 = vunpack.c.h.b16 %v145
    %v241 = vunpack.c.l.b16 %v146
    %v242 = vunpack.c.h.b16 %v146
    %v243 = vunpack.c.l.b16 %v147
    %v244 = vunpack.c.h.b16 %v147
    %v245 = vunpack.c.l.b16 %v148
    %v246 = vunpack.c.h.b16 %v148
    %v247 = vunpack.c.l.b16 %v149
    %v248 = vunpack.c.h.b16 %v149
    %v249 = vunpack.c.l.b16 %v150
    %v250 = vunpack.c.h.b16 %v150
    %v251 = vunpack.c.l.b16 %v151
    %v252 = vunpack.c.h.b16 %v151
    %v253 = vunpack.c.l.b16 %v152
    %v254 = vunpack.c.h.b16 %v152
    %v255 = vunpack.c.l.b16 %v153
    %v256 = vunpack.c.h.b16 %v153
    %v257 = vunpack.c.l.b16 %v154
    %v258 = vunpack.c.h.b16 %v154
    %v259 = vunpack.c.l.b16 %v155
    %v260 = vunpack.c.h.b16 %v155
    %v261 = vunpack.c.l.b16 %v156
    %v262 = vunpack.c.h.b16 %v156
    %v263 = vpack.c.b16 %v203, %v199
    %v264 = vpack.c.b16 %v204, %v200
    %v265 = vpack.c.b16 %v205, %v201
    %v266 = vpack.c.b16 %v206, %v202
    %v267 = vpack.c.b16 %v211, %v207
    %v268 = vpack.c.b16 %v212, %v208
    %v269 = vpack.c.b16 %v213, %v209
    %v270 = vpack.c.b16 %v214, %v210
    %v271 = vpack.c.b16 %v219, %v215
    %v272 = vpack.c.b16 %v220, %v216
    %v273 = vpack.c.b16 %v221, %v217
    %v274 = vpack.c.b16 %v222, %v218
    %v275 = vpack.c.b16 %v227, %v223
    %v276 = vpack.c.b16 %v228, %v224
    %v277 = vpack.c.b16 %v229, %v225
    %v278 = vpack.c.b16 %v230, %v226
    %v279 = vpack.c.b16 %v235, %v231
    %v280 = vpack.c.b16 %v236, %v232
    %v281 = vpack.c.b16 %v237, %v233
    %v282 = vpack.c.b16 %v238, %v234
    %v283 = vpack.c.b16 %v243, %v239
    %v284 = vpack.c.b16 %v244, %v240
    %v285 = vpack.c.b16 %v245, %v241
    %v286 = vpack.c.b16 %v246, %v242
    %v287 = vpack.c.b16 %v251, %v247
    %v288 = vpack.c.b16 %v252, %v248
    %v289 = vpack.c.b16 %v253, %v249
    %v290 = vpack.c.b16 %v254, %v250
    %v291 = vpack.c.b16 %v259, %v255
    %v292 = vpack.c.b16 %v260, %v256
    %v293 = vpack.c.b16 %v261, %v257
    %v294 = vpack.c.b16 %v262, %v258
    %327 = vmatpush.bf16.msra.mxu0 %v291
    %328 = vmatpush.bf16.msra.mxu0 %v287
    %329 = vmatpush.bf16.msra.mxu0 %v283
    %330 = vmatpush.bf16.msra.mxu0 %v279
    %331 = vmatpush.bf16.msra.mxu0 %v275
    %332 = vmatpush.bf16.msra.mxu0 %v271
    %333 = vmatpush.bf16.msra.mxu0 %v267
    %334 = vmatpush.bf16.msra.mxu0 %v263
    %335 = vmatmul.bf16.gmra.mxu0 %v124
    %v336 = vpop.f32.mrf.mxu0
    %v337 = vadd.f32 %v159, %v336
    %v338 = vpop.f32.mrf.mxu0
    %339 = vdwg.mxu0
    %340 = vmatpush.bf16.msra.mxu0 %v292
    %341 = vmatpush.bf16.msra.mxu0 %v288
    %342 = vmatpush.bf16.msra.mxu0 %v284
    %343 = vmatpush.bf16.msra.mxu0 %v280
    %344 = vmatpush.bf16.msra.mxu0 %v276
    %345 = vmatpush.bf16.msra.mxu0 %v272
    %346 = vmatpush.bf16.msra.mxu0 %v268
    %347 = vmatpush.bf16.msra.mxu0 %v264
    %348 = vmatmul.bf16.gmra.mxu0 %v124
    %v349 = vpop.f32.mrf.mxu0
    %v350 = vadd.f32 %v160, %v349
    %v351 = vpop.f32.mrf.mxu0
    %352 = vdwg.mxu0
    %353 = vmatpush.bf16.msra.mxu0 %v293
    %354 = vmatpush.bf16.msra.mxu0 %v289
    %355 = vmatpush.bf16.msra.mxu0 %v285
    %356 = vmatpush.bf16.msra.mxu0 %v281
    %357 = vmatpush.bf16.msra.mxu0 %v277
    %358 = vmatpush.bf16.msra.mxu0 %v273
    %359 = vmatpush.bf16.msra.mxu0 %v269
    %360 = vmatpush.bf16.msra.mxu0 %v265
    %361 = vmatmul.bf16.gmra.mxu0 %v124
    %v362 = vpop.f32.mrf.mxu0
    %v363 = vadd.f32 %v161, %v362
    %v364 = vpop.f32.mrf.mxu0
    %365 = vdwg.mxu0
    %366 = vmatpush.bf16.msra.mxu0 %v294
    %367 = vmatpush.bf16.msra.mxu0 %v290
    %368 = vmatpush.bf16.msra.mxu0 %v286
    %369 = vmatpush.bf16.msra.mxu0 %v282
    %370 = vmatpush.bf16.msra.mxu0 %v278
    %371 = vmatpush.bf16.msra.mxu0 %v274
    %372 = vmatpush.bf16.msra.mxu0 %v270
    %373 = vmatpush.bf16.msra.mxu0 %v266
    %374 = vmatmul.bf16.gmra.mxu0 %v124
    %v375 = vpop.f32.mrf.mxu0
    %v376 = vadd.f32 %v162, %v375
    %v377 = vpop.f32.mrf.mxu0
    %378 = vdwg.mxu0
    %v379 = vmax.f32 %v337, 0.0
    %v380 = vmax.f32 %v350, 0.0
    %v381 = vmax.f32 %v363, 0.0
    %v382 = vmax.f32 %v376, 0.0
    %v383 = vpack.c.bf16 %v379, %v379
    %v384 = vpack.c.bf16 %v380, %v380
    %v385 = vpack.c.bf16 %v381, %v381
    %v386 = vpack.c.bf16 %v382, %v382
    %v387 = vld [vmem:[#allocation8] sm:$0xff]
    %v388 = vld [vmem:[#allocation8 + $0x8] sm:$0xf]
    %v389 = vld [vmem:[#allocation8 + $0xc] sm:$0xff]
    %v390 = vld [vmem:[#allocation8 + $0x14] sm:$0xf]
    %v391 = vld [vmem:[#allocation8 + $0x18] sm:$0xff]
    %v392 = vld [vmem:[#allocation8 + $0x20] sm:$0xf]
    %v393 = vld [vmem:[#allocation8 + $0x24] sm:$0xff]
    %v394 = vld [vmem:[#allocation8 + $0x2c] sm:$0xf]
    %v395 = vld [vmem:[#allocation8 + $0x30] sm:$0xff]
    %v396 = vld [vmem:[#allocation8 + $0x38] sm:$0xf]
    %v397 = vld [vmem:[#allocation8 + $0x3c] sm:$0xff]
    %v398 = vld [vmem:[#allocation8 + $0x44] sm:$0xf]
    %v399 = vld [vmem:[#allocation8 + $0x48] sm:$0xff]
    %v400 = vld [vmem:[#allocation8 + $0x50] sm:$0xf]
    %v401 = vld [vmem:[#allocation8 + $0x54] sm:$0xff]
    %v402 = vld [vmem:[#allocation8 + $0x5c] sm:$0xf]
    %v403 = vld [vmem:[#allocation8 + $0x60] sm:$0xff]
    %v404 = vld [vmem:[#allocation8 + $0x68] sm:$0xf]
    %v405 = vld [vmem:[#allocation8 + $0x6c] sm:$0xff]
    %v406 = vld [vmem:[#allocation8 + $0x74] sm:$0xf]
    %v407 = vld [vmem:[#allocation8 + $0x78] sm:$0xff]
    %v408 = vld [vmem:[#allocation8 + $0x80] sm:$0xf]
    %v409 = vld [vmem:[#allocation8 + $0x84] sm:$0xff]
    %v410 = vld [vmem:[#allocation8 + $0x8c] sm:$0xf]
    %v411 = vld [vmem:[#allocation8 + $0x90] sm:$0xff]
    %v412 = vld [vmem:[#allocation8 + $0x98] sm:$0xf]
    %v413 = vld [vmem:[#allocation8 + $0x9c] sm:$0xff]
    %v414 = vld [vmem:[#allocation8 + $0xa4] sm:$0xf]
    %v415 = vld [vmem:[#allocation8 + $0xa8] sm:$0xff]
    %v416 = vld [vmem:[#allocation8 + $0xb0] sm:$0xf]
    %v417 = vld [vmem:[#allocation8 + $0xb4] sm:$0xff]
    %v418 = vld [vmem:[#allocation8 + $0xbc] sm:$0xf]
    %v419 = vld [vmem:[#allocation8 + $0xc0] sm:$0xff]
    %v420 = vld [vmem:[#allocation8 + $0xc8] sm:$0xf]
    %v421 = vld [vmem:[#allocation8 + $0xcc] sm:$0xff]
    %v422 = vld [vmem:[#allocation8 + $0xd4] sm:$0xf]
    %v423 = vld [vmem:[#allocation8 + $0xd8] sm:$0xff]
    %v424 = vld [vmem:[#allocation8 + $0xe0] sm:$0xf]
    %v425 = vld [vmem:[#allocation8 + $0xe4] sm:$0xff]
    %v426 = vld [vmem:[#allocation8 + $0xec] sm:$0xf]
    %v427 = vld [vmem:[#allocation8 + $0xf0] sm:$0xff]
    %v428 = vld [vmem:[#allocation8 + $0xf8] sm:$0xf]
    %v429 = vld [vmem:[#allocation8 + $0xfc] sm:$0xff]
    %v430 = vld [vmem:[#allocation8 + $0x104] sm:$0xf]
    %v431 = vld [vmem:[#allocation8 + $0x108] sm:$0xff]
    %v432 = vld [vmem:[#allocation8 + $0x110] sm:$0xf]
    %v433 = vld [vmem:[#allocation8 + $0x114] sm:$0xff]
    %v434 = vld [vmem:[#allocation8 + $0x11c] sm:$0xf]
    %v435 = vld [vmem:[#allocation8 + $0x120] sm:$0xff]
    %v436 = vld [vmem:[#allocation8 + $0x128] sm:$0xf]
    %v437 = vld [vmem:[#allocation8 + $0x12c] sm:$0xff]
    %v438 = vld [vmem:[#allocation8 + $0x134] sm:$0xf]
    %v439 = vld [vmem:[#allocation8 + $0x138] sm:$0xff]
    %v440 = vld [vmem:[#allocation8 + $0x140] sm:$0xf]
    %v441 = vld [vmem:[#allocation8 + $0x144] sm:$0xff]
    %v442 = vld [vmem:[#allocation8 + $0x14c] sm:$0xf]
    %v443 = vld [vmem:[#allocation8 + $0x150] sm:$0xff]
    %v444 = vld [vmem:[#allocation8 + $0x158] sm:$0xf]
    %v445 = vld [vmem:[#allocation8 + $0x15c] sm:$0xff]
    %v446 = vld [vmem:[#allocation8 + $0x164] sm:$0xf]
    %v447 = vld [vmem:[#allocation8 + $0x168] sm:$0xff]
    %v448 = vld [vmem:[#allocation8 + $0x170] sm:$0xf]
    %v449 = vld [vmem:[#allocation8 + $0x174] sm:$0xff]
    %v450 = vld [vmem:[#allocation8 + $0x17c] sm:$0xf]
    %v451 = vld [vmem:[#allocation8 + $0x180] sm:$0xff]
    %v452 = vld [vmem:[#allocation8 + $0x188] sm:$0xf]
    %v453 = vld [vmem:[#allocation8 + $0x18c] sm:$0xff]
    %v454 = vld [vmem:[#allocation8 + $0x194] sm:$0xf]
    %v455 = vld [vmem:[#allocation8 + $0x198] sm:$0xff]
    %v456 = vld [vmem:[#allocation8 + $0x1a0] sm:$0xf]
    %v457 = vld [vmem:[#allocation8 + $0x1a4] sm:$0xff]
    %v458 = vld [vmem:[#allocation8 + $0x1ac] sm:$0xf]
    %v459 = vld [vmem:[#allocation8 + $0x1b0] sm:$0xff]
    %v460 = vld [vmem:[#allocation8 + $0x1b8] sm:$0xf]
    %v461 = vld [vmem:[#allocation8 + $0x1bc] sm:$0xff]
    %v462 = vld [vmem:[#allocation8 + $0x1c4] sm:$0xf]
    %v463 = vld [vmem:[#allocation8 + $0x1c8] sm:$0xff]
    %v464 = vld [vmem:[#allocation8 + $0x1d0] sm:$0xf]
    %v465 = vld [vmem:[#allocation8 + $0x1d4] sm:$0xff]
    %v466 = vld [vmem:[#allocation8 + $0x1dc] sm:$0xf]
    %v467 = vld [vmem:[#allocation8 + $0x1e0] sm:$0xff]
    %v468 = vld [vmem:[#allocation8 + $0x1e8] sm:$0xf]
    %v469 = vld [vmem:[#allocation8 + $0x1ec] sm:$0xff]
    %v470 = vld [vmem:[#allocation8 + $0x1f4] sm:$0xf]
    %v471 = vld [vmem:[#allocation8 + $0x1f8] sm:$0xff]
    %v472 = vld [vmem:[#allocation8 + $0x200] sm:$0xf]
    %v473 = vld [vmem:[#allocation8 + $0x204] sm:$0xff]
    %v474 = vld [vmem:[#allocation8 + $0x20c] sm:$0xf]
    %v475 = vld [vmem:[#allocation8 + $0x210] sm:$0xff]
    %v476 = vld [vmem:[#allocation8 + $0x218] sm:$0xf]
    %v477 = vld [vmem:[#allocation8 + $0x21c] sm:$0xff]
    %v478 = vld [vmem:[#allocation8 + $0x224] sm:$0xf]
    %v479 = vld [vmem:[#allocation8 + $0x228] sm:$0xff]
    %v480 = vld [vmem:[#allocation8 + $0x230] sm:$0xf]
    %v481 = vld [vmem:[#allocation8 + $0x234] sm:$0xff]
    %v482 = vld [vmem:[#allocation8 + $0x23c] sm:$0xf]
    %v483 = vld [vmem:[#allocation8 + $0x240] sm:$0xff]
    %v484 = vld [vmem:[#allocation8 + $0x248] sm:$0xf]
    %v485 = vld [vmem:[#allocation8 + $0x24c] sm:$0xff]
    %v486 = vld [vmem:[#allocation8 + $0x254] sm:$0xf]
    %v487 = vld [vmem:[#allocation8 + $0x258] sm:$0xff]
    %v488 = vld [vmem:[#allocation8 + $0x260] sm:$0xf]
    %v489 = vld [vmem:[#allocation8 + $0x264] sm:$0xff]
    %v490 = vld [vmem:[#allocation8 + $0x26c] sm:$0xf]
    %v491 = vld [vmem:[#allocation8 + $0x270] sm:$0xff]
    %v492 = vld [vmem:[#allocation8 + $0x278] sm:$0xf]
    %v493 = vld [vmem:[#allocation8 + $0x27c] sm:$0xff]
    %v494 = vld [vmem:[#allocation8 + $0x284] sm:$0xf]
    %v495 = vld [vmem:[#allocation8 + $0x288] sm:$0xff]
    %v496 = vld [vmem:[#allocation8 + $0x290] sm:$0xf]
    %v497 = vld [vmem:[#allocation8 + $0x294] sm:$0xff]
    %v498 = vld [vmem:[#allocation8 + $0x29c] sm:$0xf]
    %v499 = vld [vmem:[#allocation8 + $0x2a0] sm:$0xff]
    %v500 = vld [vmem:[#allocation8 + $0x2a8] sm:$0xf]
    %v501 = vld [vmem:[#allocation8 + $0x2ac] sm:$0xff]
    %v502 = vld [vmem:[#allocation8 + $0x2b4] sm:$0xf]
    %v503 = vld [vmem:[#allocation8 + $0x2b8] sm:$0xff]
    %v504 = vld [vmem:[#allocation8 + $0x2c0] sm:$0xf]
    %v505 = vld [vmem:[#allocation8 + $0x2c4] sm:$0xff]
    %v506 = vld [vmem:[#allocation8 + $0x2cc] sm:$0xf]
    %v507 = vld [vmem:[#allocation8 + $0x2d0] sm:$0xff]
    %v508 = vld [vmem:[#allocation8 + $0x2d8] sm:$0xf]
    %v509 = vld [vmem:[#allocation8 + $0x2dc] sm:$0xff]
    %v510 = vld [vmem:[#allocation8 + $0x2e4] sm:$0xf]
    %v511 = vld [vmem:[#allocation8 + $0x2e8] sm:$0xff]
    %v512 = vld [vmem:[#allocation8 + $0x2f0] sm:$0xf]
    %v513 = vld [vmem:[#allocation8 + $0x2f4] sm:$0xff]
    %v514 = vld [vmem:[#allocation8 + $0x2fc] sm:$0xf]
    %v515 = vld [vmem:[%s4] sm:$0x7]
    %v517 = vperm.slane %v515, 0
    %v518 = vperm.slane %v515, 1
    %v519 = vperm.slane %v515, 2
    %v651 = vunpack.c.l.b16 %v387
    %v652 = vunpack.c.h.b16 %v387
    %v653 = vunpack.c.l.b16 %v388
    %v654 = vunpack.c.l.b16 %v389
    %v655 = vunpack.c.h.b16 %v389
    %v656 = vunpack.c.l.b16 %v390
    %v657 = vunpack.c.l.b16 %v391
    %v658 = vunpack.c.h.b16 %v391
    %v659 = vunpack.c.l.b16 %v392
    %v660 = vunpack.c.l.b16 %v393
    %v661 = vunpack.c.h.b16 %v393
    %v662 = vunpack.c.l.b16 %v394
    %v663 = vunpack.c.l.b16 %v395
    %v664 = vunpack.c.h.b16 %v395
    %v665 = vunpack.c.l.b16 %v396
    %v666 = vunpack.c.l.b16 %v397
    %v667 = vunpack.c.h.b16 %v397
    %v668 = vunpack.c.l.b16 %v398
    %v669 = vunpack.c.l.b16 %v399
    %v670 = vunpack.c.h.b16 %v399
    %v671 = vunpack.c.l.b16 %v400
    %v672 = vunpack.c.l.b16 %v401
    %v673 = vunpack.c.h.b16 %v401
    %v674 = vunpack.c.l.b16 %v402
    %v675 = vunpack.c.l.b16 %v403
    %v676 = vunpack.c.h.b16 %v403
    %v677 = vunpack.c.l.b16 %v404
    %v678 = vunpack.c.l.b16 %v405
    %v679 = vunpack.c.h.b16 %v405
    %v680 = vunpack.c.l.b16 %v406
    %v681 = vunpack.c.l.b16 %v407
    %v682 = vunpack.c.h.b16 %v407
    %v683 = vunpack.c.l.b16 %v408
    %v684 = vunpack.c.l.b16 %v409
    %v685 = vunpack.c.h.b16 %v409
    %v686 = vunpack.c.l.b16 %v410
    %v687 = vunpack.c.l.b16 %v411
    %v688 = vunpack.c.h.b16 %v411
    %v689 = vunpack.c.l.b16 %v412
    %v690 = vunpack.c.l.b16 %v413
    %v691 = vunpack.c.h.b16 %v413
    %v692 = vunpack.c.l.b16 %v414
    %v693 = vunpack.c.l.b16 %v415
    %v694 = vunpack.c.h.b16 %v415
    %v695 = vunpack.c.l.b16 %v416
    %v696 = vunpack.c.l.b16 %v417
    %v697 = vunpack.c.h.b16 %v417
    %v698 = vunpack.c.l.b16 %v418
    %v699 = vunpack.c.l.b16 %v419
    %v700 = vunpack.c.h.b16 %v419
    %v701 = vunpack.c.l.b16 %v420
    %v702 = vunpack.c.l.b16 %v421
    %v703 = vunpack.c.h.b16 %v421
    %v704 = vunpack.c.l.b16 %v422
    %v705 = vunpack.c.l.b16 %v423
    %v706 = vunpack.c.h.b16 %v423
    %v707 = vunpack.c.l.b16 %v424
    %v708 = vunpack.c.l.b16 %v425
    %v709 = vunpack.c.h.b16 %v425
    %v710 = vunpack.c.l.b16 %v426
    %v711 = vunpack.c.l.b16 %v427
    %v712 = vunpack.c.h.b16 %v427
    %v713 = vunpack.c.l.b16 %v428
    %v714 = vunpack.c.l.b16 %v429
    %v715 = vunpack.c.h.b16 %v429
    %v716 = vunpack.c.l.b16 %v430
    %v717 = vunpack.c.l.b16 %v431
    %v718 = vunpack.c.h.b16 %v431
    %v719 = vunpack.c.l.b16 %v432
    %v720 = vunpack.c.l.b16 %v433
    %v721 = vunpack.c.h.b16 %v433
    %v722 = vunpack.c.l.b16 %v434
    %v723 = vunpack.c.l.b16 %v435
    %v724 = vunpack.c.h.b16 %v435
    %v725 = vunpack.c.l.b16 %v436
    %v726 = vunpack.c.l.b16 %v437
    %v727 = vunpack.c.h.b16 %v437
    %v728 = vunpack.c.l.b16 %v438
    %v729 = vunpack.c.l.b16 %v439
    %v730 = vunpack.c.h.b16 %v439
    %v731 = vunpack.c.l.b16 %v440
    %v732 = vunpack.c.l.b16 %v441
    %v733 = vunpack.c.h.b16 %v441
    %v734 = vunpack.c.l.b16 %v442
    %v735 = vunpack.c.l.b16 %v443
    %v736 = vunpack.c.h.b16 %v443
    %v737 = vunpack.c.l.b16 %v444
    %v738 = vunpack.c.l.b16 %v445
    %v739 = vunpack.c.h.b16 %v445
    %v740 = vunpack.c.l.b16 %v446
    %v741 = vunpack.c.l.b16 %v447
    %v742 = vunpack.c.h.b16 %v447
    %v743 = vunpack.c.l.b16 %v448
    %v744 = vunpack.c.l.b16 %v449
    %v745 = vunpack.c.h.b16 %v449
    %v746 = vunpack.c.l.b16 %v450
    %v747 = vunpack.c.l.b16 %v451
    %v748 = vunpack.c.h.b16 %v451
    %v749 = vunpack.c.l.b16 %v452
    %v750 = vunpack.c.l.b16 %v453
    %v751 = vunpack.c.h.b16 %v453
    %v752 = vunpack.c.l.b16 %v454
    %v753 = vunpack.c.l.b16 %v455
    %v754 = vunpack.c.h.b16 %v455
    %v755 = vunpack.c.l.b16 %v456
    %v756 = vunpack.c.l.b16 %v457
    %v757 = vunpack.c.h.b16 %v457
    %v758 = vunpack.c.l.b16 %v458
    %v759 = vunpack.c.l.b16 %v459
    %v760 = vunpack.c.h.b16 %v459
    %v761 = vunpack.c.l.b16 %v460
    %v762 = vunpack.c.l.b16 %v461
    %v763 = vunpack.c.h.b16 %v461
    %v764 = vunpack.c.l.b16 %v462
    %v765 = vunpack.c.l.b16 %v463
    %v766 = vunpack.c.h.b16 %v463
    %v767 = vunpack.c.l.b16 %v464
    %v768 = vunpack.c.l.b16 %v465
    %v769 = vunpack.c.h.b16 %v465
    %v770 = vunpack.c.l.b16 %v466
    %v771 = vunpack.c.l.b16 %v467
    %v772 = vunpack.c.h.b16 %v467
    %v773 = vunpack.c.l.b16 %v468
    %v774 = vunpack.c.l.b16 %v469
    %v775 = vunpack.c.h.b16 %v469
    %v776 = vunpack.c.l.b16 %v470
    %v777 = vunpack.c.l.b16 %v471
    %v778 = vunpack.c.h.b16 %v471
    %v779 = vunpack.c.l.b16 %v472
    %v780 = vunpack.c.l.b16 %v473
    %v781 = vunpack.c.h.b16 %v473
    %v782 = vunpack.c.l.b16 %v474
    %v783 = vunpack.c.l.b16 %v475
    %v784 = vunpack.c.h.b16 %v475
    %v785 = vunpack.c.l.b16 %v476
    %v786 = vunpack.c.l.b16 %v477
    %v787 = vunpack.c.h.b16 %v477
    %v788 = vunpack.c.l.b16 %v478
    %v789 = vunpack.c.l.b16 %v479
    %v790 = vunpack.c.h.b16 %v479
    %v791 = vunpack.c.l.b16 %v480
    %v792 = vunpack.c.l.b16 %v481
    %v793 = vunpack.c.h.b16 %v481
    %v794 = vunpack.c.l.b16 %v482
    %v795 = vunpack.c.l.b16 %v483
    %v796 = vunpack.c.h.b16 %v483
    %v797 = vunpack.c.l.b16 %v484
    %v798 = vunpack.c.l.b16 %v485
    %v799 = vunpack.c.h.b16 %v485
    %v800 = vunpack.c.l.b16 %v486
    %v801 = vunpack.c.l.b16 %v487
    %v802 = vunpack.c.h.b16 %v487
    %v803 = vunpack.c.l.b16 %v488
    %v804 = vunpack.c.l.b16 %v489
    %v805 = vunpack.c.h.b16 %v489
    %v806 = vunpack.c.l.b16 %v490
    %v807 = vunpack.c.l.b16 %v491
    %v808 = vunpack.c.h.b16 %v491
    %v809 = vunpack.c.l.b16 %v492
    %v810 = vunpack.c.l.b16 %v493
    %v811 = vunpack.c.h.b16 %v493
    %v812 = vunpack.c.l.b16 %v494
    %v813 = vunpack.c.l.b16 %v495
    %v814 = vunpack.c.h.b16 %v495
    %v815 = vunpack.c.l.b16 %v496
    %v816 = vunpack.c.l.b16 %v497
    %v817 = vunpack.c.h.b16 %v497
    %v818 = vunpack.c.l.b16 %v498
    %v819 = vunpack.c.l.b16 %v499
    %v820 = vunpack.c.h.b16 %v499
    %v821 = vunpack.c.l.b16 %v500
    %v822 = vunpack.c.l.b16 %v501
    %v823 = vunpack.c.h.b16 %v501
    %v824 = vunpack.c.l.b16 %v502
    %v825 = vunpack.c.l.b16 %v503
    %v826 = vunpack.c.h.b16 %v503
    %v827 = vunpack.c.l.b16 %v504
    %v828 = vunpack.c.l.b16 %v505
    %v829 = vunpack.c.h.b16 %v505
    %v830 = vunpack.c.l.b16 %v506
    %v831 = vunpack.c.l.b16 %v507
    %v832 = vunpack.c.h.b16 %v507
    %v833 = vunpack.c.l.b16 %v508
    %v834 = vunpack.c.l.b16 %v509
    %v835 = vunpack.c.h.b16 %v509
    %v836 = vunpack.c.l.b16 %v510
    %v837 = vunpack.c.l.b16 %v511
    %v838 = vunpack.c.h.b16 %v511
    %v839 = vunpack.c.l.b16 %v512
    %v840 = vunpack.c.l.b16 %v513
    %v841 = vunpack.c.h.b16 %v513
    %v842 = vunpack.c.l.b16 %v514
    %v843 = vpack.c.b16 %v654, %v651
    %v844 = vpack.c.b16 %v655, %v652
    %v845 = vpack.c.b16 %v656, %v653
    %v846 = vpack.c.b16 %v660, %v657
    %v847 = vpack.c.b16 %v661, %v658
    %v848 = vpack.c.b16 %v662, %v659
    %v849 = vpack.c.b16 %v666, %v663
    %v850 = vpack.c.b16 %v667, %v664
    %v851 = vpack.c.b16 %v668, %v665
    %v852 = vpack.c.b16 %v672, %v669
    %v853 = vpack.c.b16 %v673, %v670
    %v854 = vpack.c.b16 %v674, %v671
    %v855 = vpack.c.b16 %v678, %v675
    %v856 = vpack.c.b16 %v679, %v676
    %v857 = vpack.c.b16 %v680, %v677
    %v858 = vpack.c.b16 %v684, %v681
    %v859 = vpack.c.b16 %v685, %v682
    %v860 = vpack.c.b16 %v686, %v683
    %v861 = vpack.c.b16 %v690, %v687
    %v862 = vpack.c.b16 %v691, %v688
    %v863 = vpack.c.b16 %v692, %v689
    %v864 = vpack.c.b16 %v696, %v693
    %v865 = vpack.c.b16 %v697, %v694
    %v866 = vpack.c.b16 %v698, %v695
    %v867 = vpack.c.b16 %v702, %v699
    %v868 = vpack.c.b16 %v703, %v700
    %v869 = vpack.c.b16 %v704, %v701
    %v870 = vpack.c.b16 %v708, %v705
    %v871 = vpack.c.b16 %v709, %v706
    %v872 = vpack.c.b16 %v710, %v707
    %v873 = vpack.c.b16 %v714, %v711
    %v874 = vpack.c.b16 %v715, %v712
    %v875 = vpack.c.b16 %v716, %v713
    %v876 = vpack.c.b16 %v720, %v717
    %v877 = vpack.c.b16 %v721, %v718
    %v878 = vpack.c.b16 %v722, %v719
    %v879 = vpack.c.b16 %v726, %v723
    %v880 = vpack.c.b16 %v727, %v724
    %v881 = vpack.c.b16 %v728, %v725
    %v882 = vpack.c.b16 %v732, %v729
    %v883 = vpack.c.b16 %v733, %v730
    %v884 = vpack.c.b16 %v734, %v731
    %v885 = vpack.c.b16 %v738, %v735
    %v886 = vpack.c.b16 %v739, %v736
    %v887 = vpack.c.b16 %v740, %v737
    %v888 = vpack.c.b16 %v744, %v741
    %v889 = vpack.c.b16 %v745, %v742
    %v890 = vpack.c.b16 %v746, %v743
    %v891 = vpack.c.b16 %v750, %v747
    %v892 = vpack.c.b16 %v751, %v748
    %v893 = vpack.c.b16 %v752, %v749
    %v894 = vpack.c.b16 %v756, %v753
    %v895 = vpack.c.b16 %v757, %v754
    %v896 = vpack.c.b16 %v758, %v755
    %v897 = vpack.c.b16 %v762, %v759
    %v898 = vpack.c.b16 %v763, %v760
    %v899 = vpack.c.b16 %v764, %v761
    %v900 = vpack.c.b16 %v768, %v765
    %v901 = vpack.c.b16 %v769, %v766
    %v902 = vpack.c.b16 %v770, %v767
    %v903 = vpack.c.b16 %v774, %v771
    %v904 = vpack.c.b16 %v775, %v772
    %v905 = vpack.c.b16 %v776, %v773
    %v906 = vpack.c.b16 %v780, %v777
    %v907 = vpack.c.b16 %v781, %v778
    %v908 = vpack.c.b16 %v782, %v779
    %v909 = vpack.c.b16 %v786, %v783
    %v910 = vpack.c.b16 %v787, %v784
    %v911 = vpack.c.b16 %v788, %v785
    %v912 = vpack.c.b16 %v792, %v789
    %v913 = vpack.c.b16 %v793, %v790
    %v914 = vpack.c.b16 %v794, %v791
    %v915 = vpack.c.b16 %v798, %v795
    %v916 = vpack.c.b16 %v799, %v796
    %v917 = vpack.c.b16 %v800, %v797
    %v918 = vpack.c.b16 %v804, %v801
    %v919 = vpack.c.b16 %v805, %v802
    %v920 = vpack.c.b16 %v806, %v803
    %v921 = vpack.c.b16 %v810, %v807
    %v922 = vpack.c.b16 %v811, %v808
    %v923 = vpack.c.b16 %v812, %v809
    %v924 = vpack.c.b16 %v816, %v813
    %v925 = vpack.c.b16 %v817, %v814
    %v926 = vpack.c.b16 %v818, %v815
    %v927 = vpack.c.b16 %v822, %v819
    %v928 = vpack.c.b16 %v823, %v820
    %v929 = vpack.c.b16 %v824, %v821
    %v930 = vpack.c.b16 %v828, %v825
    %v931 = vpack.c.b16 %v829, %v826
    %v932 = vpack.c.b16 %v830, %v827
    %v933 = vpack.c.b16 %v834, %v831
    %v934 = vpack.c.b16 %v835, %v832
    %v935 = vpack.c.b16 %v836, %v833
    %v936 = vpack.c.b16 %v840, %v837
    %v937 = vpack.c.b16 %v841, %v838
    %v938 = vpack.c.b16 %v842, %v839
    %1035 = vmatpush.bf16.msra.mxu0 %v864
    %1036 = vmatpush.bf16.msra.mxu0 %v861
    %1037 = vmatpush.bf16.msra.mxu0 %v858
    %1038 = vmatpush.bf16.msra.mxu0 %v855
    %1039 = vmatpush.bf16.msra.mxu0 %v852
    %1040 = vmatpush.bf16.msra.mxu0 %v849
    %1041 = vmatpush.bf16.msra.mxu0 %v846
    %1042 = vmatpush.bf16.msra.mxu0 %v843
    %1043 = vmatmul.bf16.gmra.mxu0 %v383
    %v1044 = vpop.f32.mrf.mxu0
    %v1045 = vadd.f32 %v517, %v1044
    %v1046 = vpop.f32.mrf.mxu0
    %1047 = vdwg.mxu0
    %1048 = vmatpush.bf16.msra.mxu0 %v888
    %1049 = vmatpush.bf16.msra.mxu0 %v885
    %1050 = vmatpush.bf16.msra.mxu0 %v882
    %1051 = vmatpush.bf16.msra.mxu0 %v879
    %1052 = vmatpush.bf16.msra.mxu0 %v876
    %1053 = vmatpush.bf16.msra.mxu0 %v873
    %1054 = vmatpush.bf16.msra.mxu0 %v870
    %1055 = vmatpush.bf16.msra.mxu0 %v867
    %1056 = vmatmul.bf16.gmra.mxu0 %v384
    %v1057 = vpop.f32.mrf.mxu0
    %v1058 = vadd.f32 %v1045, %v1057
    %v1059 = vpop.f32.mrf.mxu0
    %1060 = vdwg.mxu0
    %1061 = vmatpush.bf16.msra.mxu0 %v912
    %1062 = vmatpush.bf16.msra.mxu0 %v909
    %1063 = vmatpush.bf16.msra.mxu0 %v906
    %1064 = vmatpush.bf16.msra.mxu0 %v903
    %1065 = vmatpush.bf16.msra.mxu0 %v900
    %1066 = vmatpush.bf16.msra.mxu0 %v897
    %1067 = vmatpush.bf16.msra.mxu0 %v894
    %1068 = vmatpush.bf16.msra.mxu0 %v891
    %1069 = vmatmul.bf16.gmra.mxu0 %v385
    %v1070 = vpop.f32.mrf.mxu0
    %v1071 = vadd.f32 %v1058, %v1070
    %v1072 = vpop.f32.mrf.mxu0
    %1073 = vdwg.mxu0
    %1074 = vmatpush.bf16.msra.mxu0 %v936
    %1075 = vmatpush.bf16.msra.mxu0 %v933
    %1076 = vmatpush.bf16.msra.mxu0 %v930
    %1077 = vmatpush.bf16.msra.mxu0 %v927
    %1078 = vmatpush.bf16.msra.mxu0 %v924
    %1079 = vmatpush.bf16.msra.mxu0 %v921
    %1080 = vmatpush.bf16.msra.mxu0 %v918
    %1081 = vmatpush.bf16.msra.mxu0 %v915
    %1082 = vmatmul.bf16.gmra.mxu0 %v386
    %v1083 = vpop.f32.mrf.mxu0
    %v1084 = vadd.f32 %v1071, %v1083
    %v1085 = vpop.f32.mrf.mxu0
    %1086 = vdwg.mxu0
    %1087 = vmatpush.bf16.msra.mxu0 %v865
    %1088 = vmatpush.bf16.msra.mxu0 %v862
    %1089 = vmatpush.bf16.msra.mxu0 %v859
    %1090 = vmatpush.bf16.msra.mxu0 %v856
    %1091 = vmatpush.bf16.msra.mxu0 %v853
    %1092 = vmatpush.bf16.msra.mxu0 %v850
    %1093 = vmatpush.bf16.msra.mxu0 %v847
    %1094 = vmatpush.bf16.msra.mxu0 %v844
    %1095 = vmatmul.bf16.gmra.mxu0 %v383
    %v1096 = vpop.f32.mrf.mxu0
    %v1097 = vadd.f32 %v518, %v1096
    %v1098 = vpop.f32.mrf.mxu0
    %1099 = vdwg.mxu0
    %1100 = vmatpush.bf16.msra.mxu0 %v889
    %1101 = vmatpush.bf16.msra.mxu0 %v886
    %1102 = vmatpush.bf16.msra.mxu0 %v883
    %1103 = vmatpush.bf16.msra.mxu0 %v880
    %1104 = vmatpush.bf16.msra.mxu0 %v877
    %1105 = vmatpush.bf16.msra.mxu0 %v874
    %1106 = vmatpush.bf16.msra.mxu0 %v871
    %1107 = vmatpush.bf16.msra.mxu0 %v868
    %1108 = vmatmul.bf16.gmra.mxu0 %v384
    %v1109 = vpop.f32.mrf.mxu0
    %v1110 = vadd.f32 %v1097, %v1109
    %v1111 = vpop.f32.mrf.mxu0
    %1112 = vdwg.mxu0
    %1113 = vmatpush.bf16.msra.mxu0 %v913
    %1114 = vmatpush.bf16.msra.mxu0 %v910
    %1115 = vmatpush.bf16.msra.mxu0 %v907
    %1116 = vmatpush.bf16.msra.mxu0 %v904
    %1117 = vmatpush.bf16.msra.mxu0 %v901
    %1118 = vmatpush.bf16.msra.mxu0 %v898
    %1119 = vmatpush.bf16.msra.mxu0 %v895
    %1120 = vmatpush.bf16.msra.mxu0 %v892
    %1121 = vmatmul.bf16.gmra.mxu0 %v385
    %v1122 = vpop.f32.mrf.mxu0
    %v1123 = vadd.f32 %v1110, %v1122
    %v1124 = vpop.f32.mrf.mxu0
    %1125 = vdwg.mxu0
    %1126 = vmatpush.bf16.msra.mxu0 %v937
    %1127 = vmatpush.bf16.msra.mxu0 %v934
    %1128 = vmatpush.bf16.msra.mxu0 %v931
    %1129 = vmatpush.bf16.msra.mxu0 %v928
    %1130 = vmatpush.bf16.msra.mxu0 %v925
    %1131 = vmatpush.bf16.msra.mxu0 %v922
    %1132 = vmatpush.bf16.msra.mxu0 %v919
    %1133 = vmatpush.bf16.msra.mxu0 %v916
    %1134 = vmatmul.bf16.gmra.mxu0 %v386
    %v1135 = vpop.f32.mrf.mxu0
    %v1136 = vadd.f32 %v1123, %v1135
    %v1137 = vpop.f32.mrf.mxu0
    %1138 = vdwg.mxu0
    %1139 = vmatpush.bf16.msra.mxu0 %v866
    %1140 = vmatpush.bf16.msra.mxu0 %v863
    %1141 = vmatpush.bf16.msra.mxu0 %v860
    %1142 = vmatpush.bf16.msra.mxu0 %v857
    %1143 = vmatpush.bf16.msra.mxu0 %v854
    %1144 = vmatpush.bf16.msra.mxu0 %v851
    %1145 = vmatpush.bf16.msra.mxu0 %v848
    %1146 = vmatpush.bf16.msra.mxu0 %v845
    %1147 = vmatmul.bf16.gmra.mxu0 %v383
    %v1148 = vpop.f32.mrf.mxu0
    %v1149 = vadd.f32 %v519, %v1148
    %v1150 = vpop.f32.mrf.mxu0
    %1151 = vdwg.mxu0
    %1152 = vmatpush.bf16.msra.mxu0 %v890
    %1153 = vmatpush.bf16.msra.mxu0 %v887
    %1154 = vmatpush.bf16.msra.mxu0 %v884
    %1155 = vmatpush.bf16.msra.mxu0 %v881
    %1156 = vmatpush.bf16.msra.mxu0 %v878
    %1157 = vmatpush.bf16.msra.mxu0 %v875
    %1158 = vmatpush.bf16.msra.mxu0 %v872
    %1159 = vmatpush.bf16.msra.mxu0 %v869
    %1160 = vmatmul.bf16.gmra.mxu0 %v384
    %v1161 = vpop.f32.mrf.mxu0
    %v1162 = vadd.f32 %v1149, %v1161
    %v1163 = vpop.f32.mrf.mxu0
    %1164 = vdwg.mxu0
    %1165 = vmatpush.bf16.msra.mxu0 %v914
    %1166 = vmatpush.bf16.msra.mxu0 %v911
    %1167 = vmatpush.bf16.msra.mxu0 %v908
    %1168 = vmatpush.bf16.msra.mxu0 %v905
    %1169 = vmatpush.bf16.msra.mxu0 %v902
    %1170 = vmatpush.bf16.msra.mxu0 %v899
    %1171 = vmatpush.bf16.msra.mxu0 %v896
    %1172 = vmatpush.bf16.msra.mxu0 %v893
    %1173 = vmatmul.bf16.gmra.mxu0 %v385
    %v1174 = vpop.f32.mrf.mxu0
    %v1175 = vadd.f32 %v1162, %v1174
    %v1176 = vpop.f32.mrf.mxu0
    %1177 = vdwg.mxu0
    %1178 = vmatpush.bf16.msra.mxu0 %v938
    %1179 = vmatpush.bf16.msra.mxu0 %v935
    %1180 = vmatpush.bf16.msra.mxu0 %v932
    %1181 = vmatpush.bf16.msra.mxu0 %v929
    %1182 = vmatpush.bf16.msra.mxu0 %v926
    %1183 = vmatpush.bf16.msra.mxu0 %v923
    %1184 = vmatpush.bf16.msra.mxu0 %v920
    %1185 = vmatpush.bf16.msra.mxu0 %v917
    %1186 = vmatmul.bf16.gmra.mxu0 %v386
    %v1187 = vpop.f32.mrf.mxu0
    %v1188 = vadd.f32 %v1175, %v1187
    %v1189 = vpop.f32.mrf.mxu0
    %1190 = vdwg.mxu0
    %v1191 = vmax.f32 %v1084, 0.0
    %v1192 = vmax.f32 %v1136, 0.0
    %v1193 = vmax.f32 %v1188, 0.0
    %v1194 = vpack.c.bf16 %v1191, %v1191
    %v1195 = vpack.c.bf16 %v1192, %v1192
    %v1196 = vpack.c.bf16 %v1193, %v1193
    %v1197 = vld [vmem:[#allocation10] sm:$0xf]
    %v1198 = vld [vmem:[#allocation10 + $0x4] sm:$0xf]
    %v1199 = vld [vmem:[#allocation10 + $0x8] sm:$0xf]
    %v1200 = vld [vmem:[#allocation10 + $0xc] sm:$0xf]
    %v1201 = vld [vmem:[#allocation10 + $0x10] sm:$0xf]
    %v1202 = vld [vmem:[#allocation10 + $0x14] sm:$0xf]
    %v1203 = vld [vmem:[#allocation10 + $0x18] sm:$0xf]
    %v1204 = vld [vmem:[#allocation10 + $0x1c] sm:$0xf]
    %v1205 = vld [vmem:[#allocation10 + $0x20] sm:$0xf]
    %v1206 = vld [vmem:[#allocation10 + $0x24] sm:$0xf]
    %v1207 = vld [vmem:[#allocation10 + $0x28] sm:$0xf]
    %v1208 = vld [vmem:[#allocation10 + $0x2c] sm:$0xf]
    %v1209 = vld [vmem:[#allocation10 + $0x30] sm:$0xf]
    %v1210 = vld [vmem:[#allocation10 + $0x34] sm:$0xf]
    %v1211 = vld [vmem:[#allocation10 + $0x38] sm:$0xf]
    %v1212 = vld [vmem:[#allocation10 + $0x3c] sm:$0xf]
    %v1213 = vld [vmem:[#allocation10 + $0x40] sm:$0xf]
    %v1214 = vld [vmem:[#allocation10 + $0x44] sm:$0xf]
    %v1215 = vld [vmem:[#allocation10 + $0x48] sm:$0xf]
    %v1216 = vld [vmem:[#allocation10 + $0x4c] sm:$0xf]
    %v1217 = vld [vmem:[#allocation10 + $0x50] sm:$0xf]
    %v1218 = vld [vmem:[#allocation10 + $0x54] sm:$0xf]
    %v1219 = vld [vmem:[#allocation10 + $0x58] sm:$0xf]
    %v1220 = vld [vmem:[#allocation10 + $0x5c] sm:$0xf]
    %v1221 = vld [vmem:[#allocation10 + $0x60] sm:$0xf]
    %v1222 = vld [vmem:[#allocation10 + $0x64] sm:$0xf]
    %v1223 = vld [vmem:[#allocation10 + $0x68] sm:$0xf]
    %v1224 = vld [vmem:[#allocation10 + $0x6c] sm:$0xf]
    %v1225 = vld [vmem:[#allocation10 + $0x70] sm:$0xf]
    %v1226 = vld [vmem:[#allocation10 + $0x74] sm:$0xf]
    %v1227 = vld [vmem:[#allocation10 + $0x78] sm:$0xf]
    %v1228 = vld [vmem:[#allocation10 + $0x7c] sm:$0xf]
    %v1229 = vld [vmem:[#allocation10 + $0x80] sm:$0xf]
    %v1230 = vld [vmem:[#allocation10 + $0x84] sm:$0xf]
    %v1231 = vld [vmem:[#allocation10 + $0x88] sm:$0xf]
    %v1232 = vld [vmem:[#allocation10 + $0x8c] sm:$0xf]
    %v1233 = vld [vmem:[#allocation10 + $0x90] sm:$0xf]
    %v1234 = vld [vmem:[#allocation10 + $0x94] sm:$0xf]
    %v1235 = vld [vmem:[#allocation10 + $0x98] sm:$0xf]
    %v1236 = vld [vmem:[#allocation10 + $0x9c] sm:$0xf]
    %v1237 = vld [vmem:[#allocation10 + $0xa0] sm:$0xf]
    %v1238 = vld [vmem:[#allocation10 + $0xa4] sm:$0xf]
    %v1239 = vld [vmem:[#allocation10 + $0xa8] sm:$0xf]
    %v1240 = vld [vmem:[#allocation10 + $0xac] sm:$0xf]
    %v1241 = vld [vmem:[#allocation10 + $0xb0] sm:$0xf]
    %v1242 = vld [vmem:[#allocation10 + $0xb4] sm:$0xf]
    %v1243 = vld [vmem:[#allocation10 + $0xb8] sm:$0xf]
    %v1244 = vld [vmem:[#allocation10 + $0xbc] sm:$0xf]
    %v1245 = vld [vmem:[%s6] sm:$0x1]
    %v1247 = vperm.slane %v1245, 0
    %v1297 = vunpack.c.l.b16 %v1197
    %v1298 = vunpack.c.l.b16 %v1198
    %v1299 = vunpack.c.l.b16 %v1199
    %v1300 = vunpack.c.l.b16 %v1200
    %v1301 = vunpack.c.l.b16 %v1201
    %v1302 = vunpack.c.l.b16 %v1202
    %v1303 = vunpack.c.l.b16 %v1203
    %v1304 = vunpack.c.l.b16 %v1204
    %v1305 = vunpack.c.l.b16 %v1205
    %v1306 = vunpack.c.l.b16 %v1206
    %v1307 = vunpack.c.l.b16 %v1207
    %v1308 = vunpack.c.l.b16 %v1208
    %v1309 = vunpack.c.l.b16 %v1209
    %v1310 = vunpack.c.l.b16 %v1210
    %v1311 = vunpack.c.l.b16 %v1211
    %v1312 = vunpack.c.l.b16 %v1212
    %v1313 = vunpack.c.l.b16 %v1213
    %v1314 = vunpack.c.l.b16 %v1214
    %v1315 = vunpack.c.l.b16 %v1215
    %v1316 = vunpack.c.l.b16 %v1216
    %v1317 = vunpack.c.l.b16 %v1217
    %v1318 = vunpack.c.l.b16 %v1218
    %v1319 = vunpack.c.l.b16 %v1219
    %v1320 = vunpack.c.l.b16 %v1220
    %v1321 = vunpack.c.l.b16 %v1221
    %v1322 = vunpack.c.l.b16 %v1222
    %v1323 = vunpack.c.l.b16 %v1223
    %v1324 = vunpack.c.l.b16 %v1224
    %v1325 = vunpack.c.l.b16 %v1225
    %v1326 = vunpack.c.l.b16 %v1226
    %v1327 = vunpack.c.l.b16 %v1227
    %v1328 = vunpack.c.l.b16 %v1228
    %v1329 = vunpack.c.l.b16 %v1229
    %v1330 = vunpack.c.l.b16 %v1230
    %v1331 = vunpack.c.l.b16 %v1231
    %v1332 = vunpack.c.l.b16 %v1232
    %v1333 = vunpack.c.l.b16 %v1233
    %v1334 = vunpack.c.l.b16 %v1234
    %v1335 = vunpack.c.l.b16 %v1235
    %v1336 = vunpack.c.l.b16 %v1236
    %v1337 = vunpack.c.l.b16 %v1237
    %v1338 = vunpack.c.l.b16 %v1238
    %v1339 = vunpack.c.l.b16 %v1239
    %v1340 = vunpack.c.l.b16 %v1240
    %v1341 = vunpack.c.l.b16 %v1241
    %v1342 = vunpack.c.l.b16 %v1242
    %v1343 = vunpack.c.l.b16 %v1243
    %v1344 = vunpack.c.l.b16 %v1244
    %v1345 = vpack.c.b16 %v1298, %v1297
    %v1346 = vpack.c.b16 %v1300, %v1299
    %v1347 = vpack.c.b16 %v1302, %v1301
    %v1348 = vpack.c.b16 %v1304, %v1303
    %v1349 = vpack.c.b16 %v1306, %v1305
    %v1350 = vpack.c.b16 %v1308, %v1307
    %v1351 = vpack.c.b16 %v1310, %v1309
    %v1352 = vpack.c.b16 %v1312, %v1311
    %v1353 = vpack.c.b16 %v1314, %v1313
    %v1354 = vpack.c.b16 %v1316, %v1315
    %v1355 = vpack.c.b16 %v1318, %v1317
    %v1356 = vpack.c.b16 %v1320, %v1319
    %v1357 = vpack.c.b16 %v1322, %v1321
    %v1358 = vpack.c.b16 %v1324, %v1323
    %v1359 = vpack.c.b16 %v1326, %v1325
    %v1360 = vpack.c.b16 %v1328, %v1327
    %v1361 = vpack.c.b16 %v1330, %v1329
    %v1362 = vpack.c.b16 %v1332, %v1331
    %v1363 = vpack.c.b16 %v1334, %v1333
    %v1364 = vpack.c.b16 %v1336, %v1335
    %v1365 = vpack.c.b16 %v1338, %v1337
    %v1366 = vpack.c.b16 %v1340, %v1339
    %v1367 = vpack.c.b16 %v1342, %v1341
    %v1368 = vpack.c.b16 %v1344, %v1343
    %1393 = vmatpush.bf16.msra.mxu0 %v1352
    %1394 = vmatpush.bf16.msra.mxu0 %v1351
    %1395 = vmatpush.bf16.msra.mxu0 %v1350
    %1396 = vmatpush.bf16.msra.mxu0 %v1349
    %1397 = vmatpush.bf16.msra.mxu0 %v1348
    %1398 = vmatpush.bf16.msra.mxu0 %v1347
    %1399 = vmatpush.bf16.msra.mxu0 %v1346
    %1400 = vmatpush.bf16.msra.mxu0 %v1345
    %1401 = vmatmul.bf16.gmra.mxu0 %v1194
    %v1402 = vpop.f32.mrf.mxu0
    %v1403 = vadd.f32 %v1247, %v1402
    %v1404 = vpop.f32.mrf.mxu0
    %1405 = vdwg.mxu0
    %1406 = vmatpush.bf16.msra.mxu0 %v1360
    %1407 = vmatpush.bf16.msra.mxu0 %v1359
    %1408 = vmatpush.bf16.msra.mxu0 %v1358
    %1409 = vmatpush.bf16.msra.mxu0 %v1357
    %1410 = vmatpush.bf16.msra.mxu0 %v1356
    %1411 = vmatpush.bf16.msra.mxu0 %v1355
    %1412 = vmatpush.bf16.msra.mxu0 %v1354
    %1413 = vmatpush.bf16.msra.mxu0 %v1353
    %1414 = vmatmul.bf16.gmra.mxu0 %v1195
    %v1415 = vpop.f32.mrf.mxu0
    %v1416 = vadd.f32 %v1403, %v1415
    %v1417 = vpop.f32.mrf.mxu0
    %1418 = vdwg.mxu0
    %1419 = vmatpush.bf16.msra.mxu0 %v1368
    %1420 = vmatpush.bf16.msra.mxu0 %v1367
    %1421 = vmatpush.bf16.msra.mxu0 %v1366
    %1422 = vmatpush.bf16.msra.mxu0 %v1365
    %1423 = vmatpush.bf16.msra.mxu0 %v1364
    %1424 = vmatpush.bf16.msra.mxu0 %v1363
    %1425 = vmatpush.bf16.msra.mxu0 %v1362
    %1426 = vmatpush.bf16.msra.mxu0 %v1361
    %1427 = vmatmul.bf16.gmra.mxu0 %v1196
    %v1428 = vpop.f32.mrf.mxu0
    %v1429 = vadd.f32 %v1416, %v1428
    %v1430 = vpop.f32.mrf.mxu0
    %1431 = vdwg.mxu0
    %v1432 = vmax.f32 %v1429, 0.0
    %v1433 = vpack.c.bf16 %v1432, %v1432
    %v1434 = vld [vmem:[#allocation11] sm:$0xf]
    %v1435 = vld [vmem:[#allocation11 + $0x4] sm:$0xf]
    %v1436 = vld [vmem:[#allocation11 + $0x8] sm:$0xf]
    %v1437 = vld [vmem:[#allocation11 + $0xc] sm:$0xf]
    %v1438 = vld [vmem:[#allocation11 + $0x10] sm:$0xf]
    %v1439 = vld [vmem:[#allocation11 + $0x14] sm:$0xf]
    %v1440 = vld [vmem:[#allocation11 + $0x18] sm:$0xf]
    %v1441 = vld [vmem:[#allocation11 + $0x1c] sm:$0xf]
    %v1442 = vld [vmem:[#allocation11 + $0x20] sm:$0xf]
    %v1443 = vld [vmem:[#allocation11 + $0x24] sm:$0xf]
    %v1444 = vld [vmem:[#allocation11 + $0x28] sm:$0xf]
    %v1445 = vld [vmem:[#allocation11 + $0x2c] sm:$0xf]
    %v1446 = vld [vmem:[#allocation11 + $0x30] sm:$0xf]
    %v1447 = vld [vmem:[#allocation11 + $0x34] sm:$0xf]
    %v1448 = vld [vmem:[#allocation11 + $0x38] sm:$0xf]
    %v1449 = vld [vmem:[#allocation11 + $0x3c] sm:$0xf]
    %v1450 = vld [vmem:[%s8] sm:$0x1]
    %v1452 = vperm.slane %v1450, 0
    %v1470 = vunpack.c.l.b16 %v1434
    %v1471 = vunpack.c.l.b16 %v1435
    %v1472 = vunpack.c.l.b16 %v1436
    %v1473 = vunpack.c.l.b16 %v1437
    %v1474 = vunpack.c.l.b16 %v1438
    %v1475 = vunpack.c.l.b16 %v1439
    %v1476 = vunpack.c.l.b16 %v1440
    %v1477 = vunpack.c.l.b16 %v1441
    %v1478 = vunpack.c.l.b16 %v1442
    %v1479 = vunpack.c.l.b16 %v1443
    %v1480 = vunpack.c.l.b16 %v1444
    %v1481 = vunpack.c.l.b16 %v1445
    %v1482 = vunpack.c.l.b16 %v1446
    %v1483 = vunpack.c.l.b16 %v1447
    %v1484 = vunpack.c.l.b16 %v1448
    %v1485 = vunpack.c.l.b16 %v1449
    %v1486 = vpack.c.b16 %v1471, %v1470
    %v1487 = vpack.c.b16 %v1473, %v1472
    %v1488 = vpack.c.b16 %v1475, %v1474
    %v1489 = vpack.c.b16 %v1477, %v1476
    %v1490 = vpack.c.b16 %v1479, %v1478
    %v1491 = vpack.c.b16 %v1481, %v1480
    %v1492 = vpack.c.b16 %v1483, %v1482
    %v1493 = vpack.c.b16 %v1485, %v1484
    %1502 = vmatpush.bf16.msra.mxu0 %v1493
    %1503 = vmatpush.bf16.msra.mxu0 %v1492
    %1504 = vmatpush.bf16.msra.mxu0 %v1491
    %1505 = vmatpush.bf16.msra.mxu0 %v1490
    %1506 = vmatpush.bf16.msra.mxu0 %v1489
    %1507 = vmatpush.bf16.msra.mxu0 %v1488
    %1508 = vmatpush.bf16.msra.mxu0 %v1487
    %1509 = vmatpush.bf16.msra.mxu0 %v1486
    %1510 = vmatmul.bf16.gmra.mxu0 %v1433
    %v1511 = vpop.f32.mrf.mxu0
    %v1512 = vadd.f32 %v1452, %v1511
    %v1513 = vpop.f32.mrf.mxu0
    %1514 = vdwg.mxu0
    %v1515 = vlaneseq
    %v1516 = vand.u32 %v1515, 127
    %vm1517 = vcmp.lt.s32.totalorder %v1516, 5
    %vm1518 = vcmp.eq.s32.totalorder %v1516, 5
    %v1519 = vtanh.pop %v1512
    %v1520 = vxor.u32 %v1512, 2147483648
    %v1521 = vmul.f32 %v1520, 1.442695
    %v1522 = vpow.pop %v1521
    %v1523 = vadd.f32 %v1522, 1.0
    %v1524 = vrcp.pop %v1523
    %v1525 = vmul.f32 %v1523, %v1524
    %v1526 = vsub.f32 1.0, %v1525
    %v1527 = vmul.f32 %v1524, %v1526
    %v1528 = vadd.f32 %v1524, %v1527
    %vm1529 = vweird.f32 %v1523
    %vm1530 = vweird.f32 %v1524
    %vm1531 = vmor %vm1529, %vm1530
    %v1532 = vsel %vm1531, %v1524, %v1528
    %v1533 = vand.u32 2147483647, %v1523
    %vm1534 = vcmp.eq.f32.partialorder %v1533, 8.507059e+37
    %v1535 = vand.u32 %v1523, 2147483648
    %v1536 = vor.u32 1.1754944e-38, %v1535
    %v1537 = vsel %vm1534, %v1536, %v1532
    %v1538 = vmul.f32 1.0, %v1537
    %vm1539 = vcmp.gt.f32.partialorder %v1519, 0.0
    %vm1540 = vmand %vm1539, %vm1517
    %v1541 = vsel %vm1540, %v1519, 0.0
    %1542 = vadd.xlane.f32.xlu0 %v1541
    %v1543 = vpop.xlane.xlu0 %1542
    %vm1544 = vcmp.gt.f32.partialorder %v1543, 0.0
    %v1545 = vsel %vm1544, %v1543, 1.0
    %v1546 = vrcp.pop %v1545
    %v1547 = vmul.f32 %v1545, %v1546
    %v1548 = vsub.f32 1.0, %v1547
    %v1549 = vmul.f32 %v1546, %v1548
    %v1550 = vadd.f32 %v1546, %v1549
    %vm1551 = vweird.f32 %v1545
    %vm1552 = vweird.f32 %v1546
    %vm1553 = vmor %vm1551, %vm1552
    %v1554 = vsel %vm1553, %v1546, %v1550
    %v1555 = vand.u32 2147483647, %v1545
    %vm1556 = vcmp.eq.f32.partialorder %v1555, 8.507059e+37
    %v1557 = vand.u32 %v1545, 2147483648
    %v1558 = vor.u32 1.1754944e-38, %v1557
    %v1559 = vsel %vm1556, %v1558, %v1554
    %v1560 = vmul.f32 %v1519, %v1559
    %v1561 = vsel %vm1540, %v1560, %v1519
    %v1562 = vsel %vm1517, %v1561, 0.0
    %v1563 = vsel %vm1518, %v1538, %v1562
    %1564 = vst [vmem:[#allocation13] sm:$0xff] %v1563
    // Predicated region
    $region62: #{tpu_custom_call.1} parent=1 // pred_check
      _
    $region63: #{tpu_custom_call.1} parent=1 // pred_check_branch
      %1566 = sbr.rel (0) target = $region65
    $region64: #{tpu_custom_call.1} parent=1 // pred_region
      %1568 = vsyncadd [#allocation4], 0
      %s1570 = sshll.u32 [#allocation13], 4
      %s1571 = int_to_ptr.vmem [resolvable:$true] %s1570
      %s1572 = sshll.u32 %s9, 4
      %s1573 = int_to_ptr.hbm [resolvable:$true] %s1572
      %1575 = dma.vmem_to_hbm [thread:$0]  %s1571, 128, %s1573, [#allocation4]
    $region65: #{tpu_custom_call.1} parent=1 // pred_fallthru
      _
    // Predicated region
    $region66: #{tpu_custom_call.1} parent=1 // pred_check
      _
    $region67: #{tpu_custom_call.1} parent=1 // pred_check_branch
      %1577 = sbr.rel (0) target = $region69
    $region68: #{tpu_custom_call.1} parent=1 // pred_region
      %1579 = dma.done [#allocation4], 128
    $region69: #{tpu_custom_call.1} parent=1 // pred_fallthru
      _
    %1580 = vsyncpa [#allocation3], 1
    %1581 = vsyncpa [#allocation6], 1
    %1582 = vsyncpa [#allocation9], 1
    %1583 = vsyncpa [#allocation12], 1
    %1584 = vsyncpa [#allocation4], 1

</llo_original>
